<compile_context>
chip_gen: v7x
topology: tpu7x:2x2x1
jax: 0.10.0
libtpu: 0.0.40
codegen_flags: <defaults>
</compile_context>

<pallas_src>
import jax
import jax.numpy as jnp
from jax.experimental import pallas as pl
from jax.experimental.pallas import tpu as pltpu


def _round_up(x, m):
    return (x + m - 1) // m * m


def _pick_f_tile(F, target, mult=128):
    """Largest multiple-of-`mult` divisor of F that is <= target (else F itself)."""
    if F <= target:
        return F
    t = (target // mult) * mult
    while t >= mult:
        if F % t == 0:
            return t
        t -= mult
    return F  # full-F block is always layout-legal


def swiglu_kernel(x_ref, wug_ref, wd_ref, o_ref, acc_ref):
    """One (token-tile i, ffn-tile f) grid step.

    x_ref:   (tm, H)       activation tile (resident across the f axis)
    wug_ref: (H, 2*tf)     fused [up_f | gate_f] weight slice
    wd_ref:  (tf, H)       down-projection slice
    o_ref:   (tm, H)       output tile (written on the last f step)
    acc_ref: (tm, H) f32   VMEM accumulator
    """
    f = pl.program_id(1)

    @pl.when(f == 0)
    def _init():
        acc_ref[...] = jnp.zeros_like(acc_ref)

    tf = wd_ref.shape[0]
    x = x_ref[...]

    # Single fused up+gate matmul on the MXU, f32 accumulation.
    ug = jnp.dot(x, wug_ref[...], preferred_element_type=jnp.float32)  # (tm, 2*tf)
    up = ug[:, :tf]
    gate = ug[:, tf:]

    # silu(up) * gate; reciprocal lowers to the EUP slot (approx=True).
    h = up * pl.reciprocal(1.0 + jnp.exp(-up), approx=True) * gate

    # Accumulate this F slice of the down projection.
    acc_ref[...] += jnp.dot(h.astype(wd_ref.dtype), wd_ref[...],
                            preferred_element_type=jnp.float32)

    @pl.when(f == pl.num_programs(1) - 1)
    def _finalize():
        o_ref[...] = acc_ref[...].astype(o_ref.dtype)


def prepare_swiglu_weights(w_up, w_gate, w_down, tf, dtype):
    """Pre-transpose + fuse weights (do ONCE at parameter-load time in production).

    torch layouts in:  w_up/w_gate (F, H), w_down (H, F).
    Returns:
      w_ug: (H, 2*F) with per-tf-block column layout [up_0 | gate_0 | up_1 | gate_1 | ...]
      w_d : (F, H)
    """
    F, H = w_up.shape
    nf = F // tf
    wu = w_up.T.reshape(H, nf, tf)
    wg = w_gate.T.reshape(H, nf, tf)
    w_ug = jnp.stack([wu, wg], axis=2).reshape(H, 2 * F).astype(dtype)
    w_d = w_down.T.astype(dtype)
    return w_ug, w_d


def swiglu(x, w_up, w_gate, w_down, *, tm=512, tf=256):
    """x: (B, S, H).  w_up/w_gate: (F, H), w_down: (H, F)  (torch nn.Linear layouts)."""
    B, S, H = x.shape
    F = w_up.shape[0]
    M = B * S
    dtype = x.dtype
    itemsize = jnp.dtype(dtype).itemsize

    # ---- tile selection ----------------------------------------------------
    tf = _pick_f_tile(F, tf)                      # multiple of 128 dividing F (or F)
    sub = 8 * max(1, 4 // itemsize)               # sublane granularity: 8 f32, 16 bf16
    tm = max(sub, min(tm, _round_up(M, sub)))
    tm = _round_up(tm, sub)
    m_pad = _round_up(M, tm)
    # NOTE(v7x): 2 TensorCores/chip -> prefer tile sizes giving m_pad // tm >= 2.

    # ---- weight prep (once per model in production, not per call) -----------
    w_ug, w_d = prepare_swiglu_weights(w_up, w_gate, w_down, tf, dtype)

    x2 = x.reshape(M, H)
    if m_pad != M:
        x2 = jnp.pad(x2, ((0, m_pad - M), (0, 0)))

    # ---- VMEM budget: cap at 56 MiB so the same kernel fits v7x's 64 MiB ----
    vmem_bytes = (2 * (tm * H + H * 2 * tf + tf * H) * itemsize   # double-buffered inputs
                  + 2 * tm * H * itemsize                          # double-buffered output
                  + tm * H * 4)                                    # f32 accumulator
    vmem_limit = int(min(56 * 2**20, max(32 * 2**20, (vmem_bytes * 3) // 2)))

    out = pl.pallas_call(
        swiglu_kernel,
        out_shape=jax.ShapeDtypeStruct((m_pad, H), dtype),
        grid_spec=pltpu.PrefetchScalarGridSpec(
            num_scalar_prefetch=0,
            grid=(m_pad // tm, F // tf),                         # F innermost (reduction)
            in_specs=[
                pl.BlockSpec((tm, H), lambda i, f: (i, 0)),       # x tile, resident over f
                pl.BlockSpec((H, 2 * tf), lambda i, f: (0, f)),   # fused up|gate slice
                pl.BlockSpec((tf, H), lambda i, f: (f, 0)),       # down-proj slice
            ],
            out_specs=pl.BlockSpec((tm, H), lambda i, f: (i, 0)),  # lane-dense (full H)
            scratch_shapes=[pltpu.VMEM((tm, H), jnp.float32)],
        ),
        compiler_params=pltpu.CompilerParams(
            dimension_semantics=("parallel", "arbitrary"),
            vmem_limit_bytes=vmem_limit,
        ),
    )(x2, w_ug, w_d)

    if m_pad != M:
        out = out[:M]
    return out.reshape(B, S, H)


def swiglu_ref(x, w_up, w_gate, w_down):
    up = jnp.einsum("bsh,fh->bsf", x, w_up)
    gate = jnp.einsum("bsh,fh->bsf", x, w_gate)
    h = up * jax.nn.sigmoid(up) * gate
    return jnp.einsum("bsf,hf->bsh", h, w_down)


if __name__ == "__main__":
    # small config: batch=2, seq=70 (exercises the padded tail tile), hidden=128, ffn=256
    B, S, H, F = 2, 70, 128, 256

    key = jax.random.PRNGKey(0)
    kx, ku, kg, kd = jax.random.split(key, 4)

    x = jax.random.normal(kx, (B, S, H), dtype=jnp.float32)
    # nn.Linear layouts: (out, in)
    w_up = jax.random.normal(ku, (F, H), dtype=jnp.float32) * 0.02
    w_gate = jax.random.normal(kg, (F, H), dtype=jnp.float32) * 0.02
    w_down = jax.random.normal(kd, (H, F), dtype=jnp.float32) * 0.02

    y_ref = swiglu_ref(x, w_up, w_gate, w_down)

    # f32 path with small explicit tiles: exercises the 2-D grid
    # (3 M-tiles incl. padded tail, 2 F-tiles with accumulation).
    y = jax.block_until_ready(swiglu(x, w_up, w_gate, w_down, tm=64, tf=128))
    assert y.shape == (B, S, H)
    assert jnp.allclose(y, y_ref, atol=2e-3, rtol=2e-2), "f32 mismatch vs reference"

    # bf16 path with default (large) tiles: MXU-friendly production configuration.
    y_bf = jax.block_until_ready(swiglu(x.astype(jnp.bfloat16), w_up, w_gate, w_down))
    assert jnp.allclose(y_bf.astype(jnp.float32), y_ref, atol=8e-3, rtol=8e-2), \
        "bf16 mismatch vs reference"

    print("KERNEL_OK")
</pallas_src>

<mosaic_0001>
module attributes {stable_mosaic.version = 11 : i64} {
  func.func @swiglu_kernel(%arg0: i32, %arg1: i32, %arg2: memref<64x128xf32, #tpu.memory_space<vmem>>, %arg3: memref<128x256xf32, #tpu.memory_space<vmem>>, %arg4: memref<128x128xf32, #tpu.memory_space<vmem>>, %arg5: memref<64x128xf32, #tpu.memory_space<vmem>>, %arg6: memref<64x128xf32, #tpu.memory_space<vmem>>) attributes {dimension_semantics = [#tpu.dimension_semantics<parallel>, #tpu.dimension_semantics<arbitrary>], iteration_bounds = array<i64: 3, 2>, scalar_prefetch = 0 : i64, scratch_operands = 1 : i64, tpu.core_type = #tpu.core_type<tc>, window_params = [{transform_indices = @transform_0, window_bounds = array<i64: 64, 128>}, {transform_indices = @transform_1, window_bounds = array<i64: 128, 256>}, {transform_indices = @transform_2, window_bounds = array<i64: 128, 128>}, {transform_indices = @transform_3, window_bounds = array<i64: 64, 128>}]} {
    %c0_i32 = arith.constant 0 : i32
    %0 = arith.cmpi eq, %arg1, %c0_i32 : i32
    %1 = arith.extui %0 : i1 to i32
    %c0_i32_0 = arith.constant 0 : i32
    %2 = arith.cmpi ne, %1, %c0_i32_0 : i32
    scf.if %2 {
      %cst_14 = arith.constant 0.000000e+00 : f32
      %24 = vector.broadcast %cst_14 : f32 to vector<64x128xf32>
      %c0_15 = arith.constant 0 : index
      %c0_16 = arith.constant 0 : index
      %25 = vector.load %arg6[%c0_15, %c0_16] : memref<64x128xf32, #tpu.memory_space<vmem>>, vector<64x128xf32>
      tpu.vector_store %arg6[%c0_15, %c0_16], %24 {strides = array<i32>} : memref<64x128xf32, #tpu.memory_space<vmem>>, vector<64x128xf32>,
    } else {
    }
    %c0 = arith.constant 0 : index
    %c0_1 = arith.constant 0 : index
    %3 = vector.load %arg2[%c0, %c0_1] : memref<64x128xf32, #tpu.memory_space<vmem>>, vector<64x128xf32>
    %c0_2 = arith.constant 0 : index
    %c0_3 = arith.constant 0 : index
    %4 = vector.load %arg3[%c0_2, %c0_3] : memref<128x256xf32, #tpu.memory_space<vmem>>, vector<128x256xf32>
    %cst = arith.constant dense<0.000000e+00> : vector<64x256xf32>
    %5 = tpu.matmul %3, %4, %cst {dimension_numbers = #tpu.dot_dimension_numbers<[1], [0], [0], [1], [0, 0, 1, 1], [], []>} : vector<64x128xf32>, vector<128x256xf32>, vector<64x256xf32> -> vector<64x256xf32>
    %6 = vector.extract_strided_slice %5 {offsets = [0, 0], sizes = [64, 128], strides = [1, 1]} : vector<64x256xf32> to vector<64x128xf32>
    %7 = vector.extract_strided_slice %5 {offsets = [0, 128], sizes = [64, 128], strides = [1, 1]} : vector<64x256xf32> to vector<64x128xf32>
    %cst_4 = arith.constant 0.000000e+00 : f32
    %8 = vector.broadcast %cst_4 : f32 to vector<64x128xf32>
    %9 = arith.subf %8, %6 : vector<64x128xf32>
    %10 = math.exp %9 : vector<64x128xf32>
    %cst_5 = arith.constant 1.000000e+00 : f32
    %11 = vector.broadcast %cst_5 : f32 to vector<64x128xf32>
    %12 = arith.addf %11, %10 : vector<64x128xf32>
    %13 = tpu.reciprocal %12 {approx = true} : vector<64x128xf32> -> vector<64x128xf32>
    %14 = arith.mulf %6, %13 : vector<64x128xf32>
    %15 = arith.mulf %14, %7 : vector<64x128xf32>
    %c0_6 = arith.constant 0 : index
    %c0_7 = arith.constant 0 : index
    %16 = vector.load %arg6[%c0_6, %c0_7] : memref<64x128xf32, #tpu.memory_space<vmem>>, vector<64x128xf32>
    %c0_8 = arith.constant 0 : index
    %c0_9 = arith.constant 0 : index
    %17 = vector.load %arg4[%c0_8, %c0_9] : memref<128x128xf32, #tpu.memory_space<vmem>>, vector<128x128xf32>
    %cst_10 = arith.constant dense<0.000000e+00> : vector<64x128xf32>
    %18 = tpu.matmul %15, %17, %cst_10 {dimension_numbers = #tpu.dot_dimension_numbers<[1], [0], [0], [1], [0, 0, 1, 1], [], []>} : vector<64x128xf32>, vector<128x128xf32>, vector<64x128xf32> -> vector<64x128xf32>
    %19 = arith.addf %16, %18 : vector<64x128xf32>
    %c0_11 = arith.constant 0 : index
    %c0_12 = arith.constant 0 : index
    %20 = vector.load %arg6[%c0_11, %c0_12] : memref<64x128xf32, #tpu.memory_space<vmem>>, vector<64x128xf32>
    tpu.vector_store %arg6[%c0_11, %c0_12], %19 {strides = array<i32>} : memref<64x128xf32, #tpu.memory_space<vmem>>, vector<64x128xf32>,
    %c1_i32 = arith.constant 1 : i32
    %21 = arith.cmpi eq, %arg1, %c1_i32 : i32
    %22 = arith.extui %21 : i1 to i32
    %c0_i32_13 = arith.constant 0 : i32
    %23 = arith.cmpi ne, %22, %c0_i32_13 : i32
    scf.if %23 {
      %c0_14 = arith.constant 0 : index
      %c0_15 = arith.constant 0 : index
      %24 = vector.load %arg6[%c0_14, %c0_15] : memref<64x128xf32, #tpu.memory_space<vmem>>, vector<64x128xf32>
      %c0_16 = arith.constant 0 : index
      %c0_17 = arith.constant 0 : index
      %25 = vector.load %arg5[%c0_16, %c0_17] : memref<64x128xf32, #tpu.memory_space<vmem>>, vector<64x128xf32>
      tpu.vector_store %arg5[%c0_16, %c0_17], %24 {strides = array<i32>} : memref<64x128xf32, #tpu.memory_space<vmem>>, vector<64x128xf32>,
    } else {
    }
    return
  }
  func.func @transform_0(%arg0: i32, %arg1: i32) -> (i32, i32) {
    %c0_i32 = arith.constant 0 : i32
    %c0_i32_0 = arith.constant 0 : i32
    return %arg0, %c0_i32 : i32, i32
  }
  func.func @transform_1(%arg0: i32, %arg1: i32) -> (i32, i32) {
    %c0_i32 = arith.constant 0 : i32
    %c0_i32_0 = arith.constant 0 : i32
    return %c0_i32, %arg1 : i32, i32
  }
  func.func @transform_2(%arg0: i32, %arg1: i32) -> (i32, i32) {
    %c0_i32 = arith.constant 0 : i32
    %c0_i32_0 = arith.constant 0 : i32
    return %arg1, %c0_i32 : i32, i32
  }
  func.func @transform_3(%arg0: i32, %arg1: i32) -> (i32, i32) {
    %c0_i32 = arith.constant 0 : i32
    %c0_i32_0 = arith.constant 0 : i32
    return %arg0, %c0_i32 : i32, i32
  }
}

</mosaic_0001>

<llo_original>
// kernel: tpu_custom_call.1
$region0: #{tpu_custom_call.1}
  #allocation0 [shape = 'u32[]', space=smem, size = 0x4, offset = 0x4, fixed_abs, tag = 'smem constant byte address 0x4 - core index']
  #allocation1 [shape = 'u32[144,128]{1,0:T(1,128)}', space=vmem, size = 0x12000, scoped, tag = 'internal scratch']
  #allocation2 [shape = 'f32[64,128]{1,0:T(8,128)}', space=vmem, size = 0x8000, scoped, tag = 'scratch operand']
  %s0 = inlined_call_operand.hbm [shape: f32[192,128], index: 0, kind: input, shape index: {}]
  %s1 = inlined_call_operand.hbm [shape: f32[128,512], index: 1, kind: input, shape index: {}]
  %s2 = inlined_call_operand.hbm [shape: f32[256,128], index: 2, kind: input, shape index: {}]
  %s3 = inlined_call_operand.hbm [shape: f32[192,128], index: 3, kind: output, shape index: {}]
  %s4 = sld [smem:[#allocation0]]
  $region65: #{tpu_custom_call.1} parent=0
    _
  %s6 = ssub.s32 1, %s4
  %s7 = scalar_select 0, %s6, %s4
  $region1: #{tpu_custom_call.1} parent=0
    #allocation3 [shape = 'u8[65536]{0}', space=vmem, size = 0x10000, scoped, tag = 'input window, operand 0']
    #allocation4 [shape = 's32[2]{0}', space=sflag, size = 0x8, scoped, tag = 'scoped memory for tpu_custom_call.1']
    #allocation5 [shape = 's32[2]{0}', space=sflag, size = 0x8, scoped, tag = 'scoped memory for tpu_custom_call.1']
    #allocation6 [shape = 'u8[262144]{0}', space=vmem, size = 0x40000, scoped, tag = 'input window, operand 1']
    #allocation7 [shape = 's32[2]{0}', space=sflag, size = 0x8, scoped, tag = 'scoped memory for tpu_custom_call.1']
    #allocation8 [shape = 'u8[131072]{0}', space=vmem, size = 0x20000, scoped, tag = 'input window, operand 2']
    #allocation9 [shape = 'u8[65536]{0}', space=vmem, size = 0x10000, scoped, tag = 'output window, operand 0']
    %8 = vsyncpa [#allocation4], 0
    %s9 = scalar_lea.sflag [#allocation4], 1
    %10 = vsyncpa %s9, 0
    %11 = vsyncpa [#allocation7], 0
    %s12 = scalar_lea.sflag [#allocation7], 1
    %13 = vsyncpa %s12, 0
    %14 = vsyncpa [#allocation5], 0
    %s15 = scalar_lea.sflag [#allocation5], 1
    %16 = vsyncpa %s15, 0
    loop: start=0, step=1, limit=8
    $region2: #{tpu_custom_call.1} parent=1 // loop_pre_header
      _
    $region3: #{tpu_custom_call.1} parent=1 // loop_header
      %s18 = sphi 0, %s22
      %p19 = scmp.ge.s32.totalorder %s18, 8
      %s25 = sphi 0, %s37
      %s26 = sphi 0, %s33
      %s27 = sphi 0, %s25
      %s28 = sphi 0, %s26
      %s29 = sphi 0, %s27
      %s30 = sphi 0, %s28
      %s40 = sphi 0, %s42
      %s43 = sphi 0, %s40
      %s44 = sphi 0, %s43
      %s60 = sphi 0, %s44
      %s66 = sphi 0, %s68
      %s69 = sphi 0, %s66
      %s70 = sphi 0, %s69
      %s86 = sphi 0, %s70
      %s92 = sphi 0, %s94
      %s95 = sphi 0, %s92
      %s96 = sphi 0, %s95
      %s112 = sphi 0, %s96
      %s118 = sphi 0, %s120
      %s121 = sphi 0, %s118
      %s122 = sphi 0, %s121
      %s138 = sphi 0, %s122
    $region4: #{tpu_custom_call.1} parent=1 // loop_header_branch
      %21 = sbr.rel (%p19) target = $region8
    $region5: #{tpu_custom_call.1} parent=1 // loop_body
      %s23 = ssub.s32 %s18, 1
      %s24 = ssub.s32 %s18, 2
      %s31 = sadd.s32 1, %s26
      %p32 = scmp.ge.s32.totalorder %s31, 2
      %s33 = scalar_select %p32, 0, %s31
      %s34 = sadd.s32 1, %s25
      %s35 = scalar_select %p32, %s34, %s25
      %p36 = scmp.ge.s32.totalorder %s35, 3
      %s37 = scalar_select %p36, 0, %s35
      %s38 = ssub.s32 %s25, %s37
      %p39 = scmp.eq.s32.totalorder %s38, 0
      %s41 = sadd.s32 %s40, 1
      %s42 = scalar_select %p39, %s40, %s41
      %p45 = pneg %p39
      %p46 = scmp.eq.s32.totalorder %s18, 5
      %p47 = por %p45, %p46
      %p48 = scmp.ne.s32.totalorder %s40, %s43
      %p49 = scmp.eq.s32.totalorder %s18, 0
      %p50 = por %p48, %p49
      %p51 = scmp.ne.s32.totalorder %s40, %s43
      %p52 = scmp.eq.s32.totalorder %s23, 5
      %p53 = por %p51, %p52
      %p54 = scmp.ne.s32.totalorder %s43, %s44
      %p55 = scmp.eq.s32.totalorder %s23, 0
      %p56 = por %p54, %p55
      %p57 = scmp.ne.s32.totalorder %s43, %s44
      %p58 = scmp.eq.s32.totalorder %s24, 5
      %p59 = por %p57, %p58
      %p61 = scmp.ne.s32.totalorder %s44, %s60
      %p62 = scmp.eq.s32.totalorder %s24, 0
      %p63 = por %p61, %p62
      %s64 = ssub.s32 %s26, %s33
      %p65 = scmp.eq.s32.totalorder %s64, 0
      %s67 = sadd.s32 %s66, 1
      %s68 = scalar_select %p65, %s66, %s67
      %p71 = pneg %p65
      %p72 = scmp.eq.s32.totalorder %s18, 5
      %p73 = por %p71, %p72
      %p74 = scmp.ne.s32.totalorder %s66, %s69
      %p75 = scmp.eq.s32.totalorder %s18, 0
      %p76 = por %p74, %p75
      %p77 = scmp.ne.s32.totalorder %s66, %s69
      %p78 = scmp.eq.s32.totalorder %s23, 5
      %p79 = por %p77, %p78
      %p80 = scmp.ne.s32.totalorder %s69, %s70
      %p81 = scmp.eq.s32.totalorder %s23, 0
      %p82 = por %p80, %p81
      %p83 = scmp.ne.s32.totalorder %s69, %s70
      %p84 = scmp.eq.s32.totalorder %s24, 5
      %p85 = por %p83, %p84
      %p87 = scmp.ne.s32.totalorder %s70, %s86
      %p88 = scmp.eq.s32.totalorder %s24, 0
      %p89 = por %p87, %p88
      %s90 = ssub.s32 %s26, %s33
      %p91 = scmp.eq.s32.totalorder %s90, 0
      %s93 = sadd.s32 %s92, 1
      %s94 = scalar_select %p91, %s92, %s93
      %p97 = pneg %p91
      %p98 = scmp.eq.s32.totalorder %s18, 5
      %p99 = por %p97, %p98
      %p100 = scmp.ne.s32.totalorder %s92, %s95
      %p101 = scmp.eq.s32.totalorder %s18, 0
      %p102 = por %p100, %p101
      %p103 = scmp.ne.s32.totalorder %s92, %s95
      %p104 = scmp.eq.s32.totalorder %s23, 5
      %p105 = por %p103, %p104
      %p106 = scmp.ne.s32.totalorder %s95, %s96
      %p107 = scmp.eq.s32.totalorder %s23, 0
      %p108 = por %p106, %p107
      %p109 = scmp.ne.s32.totalorder %s95, %s96
      %p110 = scmp.eq.s32.totalorder %s24, 5
      %p111 = por %p109, %p110
      %p113 = scmp.ne.s32.totalorder %s96, %s112
      %p114 = scmp.eq.s32.totalorder %s24, 0
      %p115 = por %p113, %p114
      %s116 = ssub.s32 %s25, %s37
      %p117 = scmp.eq.s32.totalorder %s116, 0
      %s119 = sadd.s32 %s118, 1
      %s120 = scalar_select %p117, %s118, %s119
      %p123 = pneg %p117
      %p124 = scmp.eq.s32.totalorder %s18, 5
      %p125 = por %p123, %p124
      %p126 = scmp.ne.s32.totalorder %s118, %s121
      %p127 = scmp.eq.s32.totalorder %s18, 0
      %p128 = por %p126, %p127
      %p129 = scmp.ne.s32.totalorder %s118, %s121
      %p130 = scmp.eq.s32.totalorder %s23, 5
      %p131 = por %p129, %p130
      %p132 = scmp.ne.s32.totalorder %s121, %s122
      %p133 = scmp.eq.s32.totalorder %s23, 0
      %p134 = por %p132, %p133
      %p135 = scmp.ne.s32.totalorder %s121, %s122
      %p136 = scmp.eq.s32.totalorder %s24, 5
      %p137 = por %p135, %p136
      %p139 = scmp.ne.s32.totalorder %s122, %s138
      %p140 = scmp.eq.s32.totalorder %s24, 0
      %p141 = por %p139, %p140
      %p142 = scmp.le.s32.totalorder 1, %s18
      %p143 = scmp.lt.s32.totalorder %s18, 7
      %p144 = pnand %p142, %p143
      %p145 = pneg %p144
      // Predicated region
      $region9: #{tpu_custom_call.1} parent=5 // pred_check
        _
      $region10: #{tpu_custom_call.1} parent=5 // pred_check_branch
        %147 = sbr.rel (%p144) target = $region12
      $region11: #{tpu_custom_call.1} parent=5 // pred_region
        %s148 = ssub.s32 %s18, 1
      $region12: #{tpu_custom_call.1} parent=5 // pred_fallthru
        _
      %p149 = scmp.lt.s32.totalorder %s18, 6
      // Predicated region
      $region13: #{tpu_custom_call.1} parent=5 // pred_check
        %p150 = pneg %p149
      $region14: #{tpu_custom_call.1} parent=5 // pred_check_branch
        %152 = sbr.rel (%p150) target = $region16
      $region15: #{tpu_custom_call.1} parent=5 // pred_region
        // Predicated region
        $region17: #{tpu_custom_call.1} parent=15 // pred_check
          %p153 = pneg %p50
        $region18: #{tpu_custom_call.1} parent=15 // pred_check_branch
          %155 = sbr.rel (%p153) target = $region20
        $region19: #{tpu_custom_call.1} parent=15 // pred_region
          %s156 = sand.u32 %s40, 1
          %s157 = scalar_lea.sflag [#allocation4], %s156
          %s158 = sand.u32 %s40, 1
          %s159 = smul.addr %s158, 64
          %s160 = scalar_lea.vmem [#allocation3], %s159
          %s161 = smul.u32 8, %s25
          %s163 = ssub.s32 1024, 1024
          %164 = vsyncadd %s157, %s163
          %s165 = smul.addr %s161, 128
          %s166 = scalar_lea.hbm %s0, %s165
          %s167 = sshll.u32 %s160, 4
          %s168 = int_to_ptr.vmem [resolvable:$true] %s167
          %173 = dma.hbm_to_vmem [thread:$0]  %s166, 1024, %s168, %s157, 128, 128, 8
        $region20: #{tpu_custom_call.1} parent=15 // pred_fallthru
          _
        // Predicated region
        $region21: #{tpu_custom_call.1} parent=15 // pred_check
          %p174 = pneg %p76
        $region22: #{tpu_custom_call.1} parent=15 // pred_check_branch
          %176 = sbr.rel (%p174) target = $region24
        $region23: #{tpu_custom_call.1} parent=15 // pred_region
          %s177 = sand.u32 %s18, 1
          %s178 = scalar_lea.sflag [#allocation7], %s177
          %s179 = sand.u32 %s66, 1
          %s180 = smul.addr %s179, 256
          %s181 = scalar_lea.vmem [#allocation6], %s180
          %s182 = smul.u32 2, %s26
          %s184 = ssub.s32 4096, 4096
          %185 = vsyncadd %s178, %s184
          %s186 = smul.addr %s182, 128
          %s187 = scalar_lea.hbm %s1, %s186
          %s188 = sshll.u32 %s181, 4
          %s189 = int_to_ptr.vmem [resolvable:$true] %s188
          %194 = dma.hbm_to_vmem [thread:$0]  %s187, 4096, %s189, %s178, 512, 256, 16
        $region24: #{tpu_custom_call.1} parent=15 // pred_fallthru
          _
        // Predicated region
        $region25: #{tpu_custom_call.1} parent=15 // pred_check
          %p195 = pneg %p102
        $region26: #{tpu_custom_call.1} parent=15 // pred_check_branch
          %197 = sbr.rel (%p195) target = $region28
        $region27: #{tpu_custom_call.1} parent=15 // pred_region
          %s198 = sand.u32 %s18, 1
          %s199 = scalar_lea.sflag [#allocation7], %s198
          %s200 = sand.u32 %s92, 1
          %s201 = smul.addr %s200, 128
          %s202 = scalar_lea.vmem [#allocation8], %s201
          %s203 = smul.u32 16, %s26
          %s205 = ssub.s32 2048, 2048
          %206 = vsyncadd %s199, %s205
          %s207 = smul.addr %s203, 128
          %s208 = scalar_lea.hbm %s2, %s207
          %s209 = sshll.u32 %s202, 4
          %s210 = int_to_ptr.vmem [resolvable:$true] %s209
          %215 = dma.hbm_to_vmem [thread:$0]  %s208, 2048, %s210, %s199, 128, 128, 8
        $region28: #{tpu_custom_call.1} parent=15 // pred_fallthru
          _
      $region16: #{tpu_custom_call.1} parent=5 // pred_fallthru
        _
      %p216 = scmp.le.s32.totalorder 1, %s18
      %p217 = scmp.lt.s32.totalorder %s18, 7
      %p218 = pnand %p216, %p217
      %p219 = pneg %p218
      // Predicated region
      $region29: #{tpu_custom_call.1} parent=5 // pred_check
        _
      $region30: #{tpu_custom_call.1} parent=5 // pred_check_branch
        %221 = sbr.rel (%p218) target = $region32
      $region31: #{tpu_custom_call.1} parent=5 // pred_region
        %s222 = ssub.s32 %s18, 1
        %s223 = sand.u32 %s43, 1
        %s224 = scalar_lea.sflag [#allocation4], %s223
        %s225 = sand.u32 %s43, 1
        %s226 = smul.addr %s225, 64
        %s227 = scalar_lea.vmem [#allocation3], %s226
        // Predicated region
        $region33: #{tpu_custom_call.1} parent=31 // pred_check
          %p228 = pneg %p56
        $region34: #{tpu_custom_call.1} parent=31 // pred_check_branch
          %230 = sbr.rel (%p228) target = $region36
        $region35: #{tpu_custom_call.1} parent=31 // pred_region
          %231 = dma.done %s224, 1024
        $region36: #{tpu_custom_call.1} parent=31 // pred_fallthru
          _
        %s232 = sand.u32 %s23, 1
        %s233 = scalar_lea.sflag [#allocation7], %s232
        %s234 = sand.u32 %s69, 1
        %s235 = smul.addr %s234, 256
        %s236 = scalar_lea.vmem [#allocation6], %s235
        // Predicated region
        $region37: #{tpu_custom_call.1} parent=31 // pred_check
          %p237 = pneg %p82
        $region38: #{tpu_custom_call.1} parent=31 // pred_check_branch
          %239 = sbr.rel (%p237) target = $region40
        $region39: #{tpu_custom_call.1} parent=31 // pred_region
          %240 = dma.done %s233, 4096
        $region40: #{tpu_custom_call.1} parent=31 // pred_fallthru
          _
        %s241 = sand.u32 %s23, 1
        %s242 = scalar_lea.sflag [#allocation7], %s241
        %s243 = sand.u32 %s95, 1
        %s244 = smul.addr %s243, 128
        %s245 = scalar_lea.vmem [#allocation8], %s244
        // Predicated region
        $region41: #{tpu_custom_call.1} parent=31 // pred_check
          %p246 = pneg %p108
        $region42: #{tpu_custom_call.1} parent=31 // pred_check_branch
          %248 = sbr.rel (%p246) target = $region44
        $region43: #{tpu_custom_call.1} parent=31 // pred_region
          %249 = dma.done %s242, 2048
        $region44: #{tpu_custom_call.1} parent=31 // pred_fallthru
          _
        %s250 = sand.u32 %s43, 1
        %s251 = scalar_lea.sflag [#allocation4], %s250
        %s252 = sand.u32 %s43, 1
        %s253 = smul.addr %s252, 64
        %s254 = scalar_lea.vmem [#allocation3], %s253
        %p255 = pneg %p56
        %p256 = pneg %p53
        %s257 = sand.u32 %s23, 1
        %s258 = scalar_lea.sflag [#allocation7], %s257
        %s259 = sand.u32 %s69, 1
        %s260 = smul.addr %s259, 256
        %s261 = scalar_lea.vmem [#allocation6], %s260
        %p262 = pneg %p82
        %p263 = pneg %p79
        %s264 = sand.u32 %s23, 1
        %s265 = scalar_lea.sflag [#allocation7], %s264
        %s266 = sand.u32 %s95, 1
        %s267 = smul.addr %s266, 128
        %s268 = scalar_lea.vmem [#allocation8], %s267
        %p269 = pneg %p108
        %p270 = pneg %p105
        %p271 = pneg %p134
        %p272 = pneg %p131
        %s273 = sand.u32 %s121, 1
        %s274 = scalar_lea.sflag [#allocation5], %s273
        %s275 = sand.u32 %s121, 1
        %s276 = smul.addr %s275, 64
        %s277 = scalar_lea.vmem [#allocation9], %s276
        %s278 = smul.u32 8, %s27
        %s279 = smul.u32 2, %s28
        %s280 = smul.u32 16, %s28
        %s281 = smul.u32 8, %s27
        %p282 = scmp.eq.s32.totalorder %s28, 0
        // Predicated region
        $region45: #{tpu_custom_call.1} parent=31 // pred_check
          %p283 = pneg %p282
        $region46: #{tpu_custom_call.1} parent=31 // pred_check_branch
          %285 = sbr.rel (%p283) target = $region48
        $region47: #{tpu_custom_call.1} parent=31 // pred_region
          %286 = vst [vmem:[#allocation2] sm:$0xff] 0.0
          %287 = vst [vmem:[#allocation2 + $0x8] sm:$0xff] 0.0
          %288 = vst [vmem:[#allocation2 + $0x10] sm:$0xff] 0.0
          %289 = vst [vmem:[#allocation2 + $0x18] sm:$0xff] 0.0
          %290 = vst [vmem:[#allocation2 + $0x20] sm:$0xff] 0.0
          %291 = vst [vmem:[#allocation2 + $0x28] sm:$0xff] 0.0
          %292 = vst [vmem:[#allocation2 + $0x30] sm:$0xff] 0.0
          %293 = vst [vmem:[#allocation2 + $0x38] sm:$0xff] 0.0
        $region48: #{tpu_custom_call.1} parent=31 // pred_fallthru
          _
        %v294 = vld [vmem:[%s227] sm:$0xff]
        %v295 = vld [vmem:[%s227 + $0x8] sm:$0xff]
        %v296 = vld [vmem:[%s227 + $0x10] sm:$0xff]
        %v297 = vld [vmem:[%s227 + $0x18] sm:$0xff]
        %v298 = vld [vmem:[%s227 + $0x20] sm:$0xff]
        %v299 = vld [vmem:[%s227 + $0x28] sm:$0xff]
        %v300 = vld [vmem:[%s227 + $0x30] sm:$0xff]
        %v301 = vld [vmem:[%s227 + $0x38] sm:$0xff]
        %v302 = vld [vmem:[%s236] sm:$0xff]
        %v303 = vld [vmem:[%s236 + $0x8] sm:$0xff]
        %v304 = vld [vmem:[%s236 + $0x10] sm:$0xff]
        %v305 = vld [vmem:[%s236 + $0x18] sm:$0xff]
        %v306 = vld [vmem:[%s236 + $0x20] sm:$0xff]
        %v307 = vld [vmem:[%s236 + $0x28] sm:$0xff]
        %v308 = vld [vmem:[%s236 + $0x30] sm:$0xff]
        %v309 = vld [vmem:[%s236 + $0x38] sm:$0xff]
        %v310 = vld [vmem:[%s236 + $0x40] sm:$0xff]
        %v311 = vld [vmem:[%s236 + $0x48] sm:$0xff]
        %v312 = vld [vmem:[%s236 + $0x50] sm:$0xff]
        %v313 = vld [vmem:[%s236 + $0x58] sm:$0xff]
        %v314 = vld [vmem:[%s236 + $0x60] sm:$0xff]
        %v315 = vld [vmem:[%s236 + $0x68] sm:$0xff]
        %v316 = vld [vmem:[%s236 + $0x70] sm:$0xff]
        %v317 = vld [vmem:[%s236 + $0x78] sm:$0xff]
        %v318 = vld [vmem:[%s236 + $0x80] sm:$0xff]
        %v319 = vld [vmem:[%s236 + $0x88] sm:$0xff]
        %v320 = vld [vmem:[%s236 + $0x90] sm:$0xff]
        %v321 = vld [vmem:[%s236 + $0x98] sm:$0xff]
        %v322 = vld [vmem:[%s236 + $0xa0] sm:$0xff]
        %v323 = vld [vmem:[%s236 + $0xa8] sm:$0xff]
        %v324 = vld [vmem:[%s236 + $0xb0] sm:$0xff]
        %v325 = vld [vmem:[%s236 + $0xb8] sm:$0xff]
        %v326 = vld [vmem:[%s236 + $0xc0] sm:$0xff]
        %v327 = vld [vmem:[%s236 + $0xc8] sm:$0xff]
        %v328 = vld [vmem:[%s236 + $0xd0] sm:$0xff]
        %v329 = vld [vmem:[%s236 + $0xd8] sm:$0xff]
        %v330 = vld [vmem:[%s236 + $0xe0] sm:$0xff]
        %v331 = vld [vmem:[%s236 + $0xe8] sm:$0xff]
        %v332 = vld [vmem:[%s236 + $0xf0] sm:$0xff]
        %v333 = vld [vmem:[%s236 + $0xf8] sm:$0xff]
        %334 = vmatprep.subr.mxu0 %v303
        %335 = vmatpush1.msra.mxu0 %v302
        %336 = vmatprep.subr.mxu0 %v305
        %337 = vmatpush1.msra.mxu0 %v304
        %338 = vmatprep.subr.mxu0 %v307
        %339 = vmatpush1.msra.mxu0 %v306
        %340 = vmatprep.subr.mxu0 %v309
        %341 = vmatpush1.msra.mxu0 %v308
        %342 = vmatprep.subr.mxu0 %v311
        %343 = vmatpush1.msra.mxu0 %v310
        %344 = vmatprep.subr.mxu0 %v313
        %345 = vmatpush1.msra.mxu0 %v312
        %346 = vmatprep.subr.mxu0 %v315
        %347 = vmatpush1.msra.mxu0 %v314
        %348 = vmatprep.subr.mxu0 %v317
        %349 = vmatpush1.msra.mxu0 %v316
        %350 = vmatprep.subr.mxu0 %v319
        %351 = vmatpush1.msra.mxu0 %v318
        %352 = vmatprep.subr.mxu0 %v321
        %353 = vmatpush1.msra.mxu0 %v320
        %354 = vmatprep.subr.mxu0 %v323
        %355 = vmatpush1.msra.mxu0 %v322
        %356 = vmatprep.subr.mxu0 %v325
        %357 = vmatpush1.msra.mxu0 %v324
        %358 = vmatprep.subr.mxu0 %v327
        %359 = vmatpush1.msra.mxu0 %v326
        %360 = vmatprep.subr.mxu0 %v329
        %361 = vmatpush1.msra.mxu0 %v328
        %362 = vmatprep.subr.mxu0 %v331
        %363 = vmatpush1.msra.mxu0 %v330
        %364 = vmatprep.subr.mxu0 %v333
        %365 = vmatpush1.msra.mxu0 %v332
        %366 = vmatprep.subr.mxu0 0.0
        %367 = vmatpush1.msra.mxu0 0.0
        %368 = vmatprep.subr.mxu0 0.0
        %369 = vmatpush1.msra.mxu0 0.0
        %370 = vmatprep.subr.mxu0 0.0
        %371 = vmatpush1.msra.mxu0 0.0
        %372 = vmatprep.subr.mxu0 0.0
        %373 = vmatpush1.msra.mxu0 0.0
        %374 = vmatprep.subr.mxu0 0.0
        %375 = vmatpush1.msra.mxu0 0.0
        %376 = vmatprep.subr.mxu0 0.0
        %377 = vmatpush1.msra.mxu0 0.0
        %378 = vmatprep.subr.mxu0 0.0
        %379 = vmatpush1.msra.mxu0 0.0
        %380 = vmatprep.subr.mxu0 0.0
        %381 = vmatpush1.msra.mxu0 0.0
        %382 = vmatprep.subr.mxu0 0.0
        %383 = vmatpush1.msra.mxu0 0.0
        %384 = vmatprep.subr.mxu0 0.0
        %385 = vmatpush1.msra.mxu0 0.0
        %386 = vmatprep.subr.mxu0 0.0
        %387 = vmatpush1.msra.mxu0 0.0
        %388 = vmatprep.subr.mxu0 0.0
        %389 = vmatpush1.msra.mxu0 0.0
        %390 = vmatprep.subr.mxu0 0.0
        %391 = vmatpush1.msra.mxu0 0.0
        %392 = vmatprep.subr.mxu0 0.0
        %393 = vmatpush1.msra.mxu0 0.0
        %394 = vmatprep.subr.mxu0 0.0
        %395 = vmatpush1.msra.mxu0 0.0
        %396 = vmatprep.subr.mxu0 0.0
        %397 = vmatpush1.msra.mxu0 0.0
        %398 = vmatprep.mubr.f32.mxu0 0.0
        %399 = vmatmul.mubr.f32.gmra.mrb[0].mxu0 %v294
        %v400 = vpop.f32.mrb[0].mxu0
        %v401 = vadd.f32 0.0, %v400
        %v402 = vpop.f32.mrb[0].mxu0
        %v403 = vadd.f32 0.0, %v402
        %404 = vmatprep.mubr.f32.mxu0 0.0
        %405 = vmatmul.mubr.f32.gmra.mrb[0].mxu0 %v295
        %v406 = vpop.f32.mrb[0].mxu0
        %v407 = vadd.f32 0.0, %v406
        %v408 = vpop.f32.mrb[0].mxu0
        %v409 = vadd.f32 0.0, %v408
        %410 = vmatprep.mubr.f32.mxu0 0.0
        %411 = vmatmul.mubr.f32.gmra.mrb[0].mxu0 %v296
        %v412 = vpop.f32.mrb[0].mxu0
        %v413 = vadd.f32 0.0, %v412
        %v414 = vpop.f32.mrb[0].mxu0
        %v415 = vadd.f32 0.0, %v414
        %416 = vmatprep.mubr.f32.mxu0 0.0
        %417 = vmatmul.mubr.f32.gmra.mrb[0].mxu0 %v297
        %v418 = vpop.f32.mrb[0].mxu0
        %v419 = vadd.f32 0.0, %v418
        %v420 = vpop.f32.mrb[0].mxu0
        %v421 = vadd.f32 0.0, %v420
        %422 = vmatprep.mubr.f32.mxu0 0.0
        %423 = vmatmul.mubr.f32.gmra.mrb[0].mxu0 %v298
        %v424 = vpop.f32.mrb[0].mxu0
        %v425 = vadd.f32 0.0, %v424
        %v426 = vpop.f32.mrb[0].mxu0
        %v427 = vadd.f32 0.0, %v426
        %428 = vmatprep.mubr.f32.mxu0 0.0
        %429 = vmatmul.mubr.f32.gmra.mrb[0].mxu0 %v299
        %v430 = vpop.f32.mrb[0].mxu0
        %v431 = vadd.f32 0.0, %v430
        %v432 = vpop.f32.mrb[0].mxu0
        %v433 = vadd.f32 0.0, %v432
        %434 = vmatprep.mubr.f32.mxu0 0.0
        %435 = vmatmul.mubr.f32.gmra.mrb[0].mxu0 %v300
        %v436 = vpop.f32.mrb[0].mxu0
        %v437 = vadd.f32 0.0, %v436
        %v438 = vpop.f32.mrb[0].mxu0
        %v439 = vadd.f32 0.0, %v438
        %440 = vmatprep.mubr.f32.mxu0 0.0
        %441 = vmatmul.mubr.f32.gmra.mrb[0].mxu0 %v301
        %v442 = vpop.f32.mrb[0].mxu0
        %v443 = vadd.f32 0.0, %v442
        %v444 = vpop.f32.mrb[0].mxu0
        %v445 = vadd.f32 0.0, %v444
        %446 = vdwg.mxu0
        %v447 = vsub.f32 0.0, %v401
        %v448 = vsub.f32 0.0, %v407
        %v449 = vsub.f32 0.0, %v413
        %v450 = vsub.f32 0.0, %v419
        %v451 = vsub.f32 0.0, %v425
        %v452 = vsub.f32 0.0, %v431
        %v453 = vsub.f32 0.0, %v437
        %v454 = vsub.f32 0.0, %v443
        %v455 = vmul.f32 %v447, 1.442695
        %v456 = vpow.pop %v455
        %v457 = vmul.f32 %v448, 1.442695
        %v458 = vpow.pop %v457
        %v459 = vmul.f32 %v449, 1.442695
        %v460 = vpow.pop %v459
        %v461 = vmul.f32 %v450, 1.442695
        %v462 = vpow.pop %v461
        %v463 = vmul.f32 %v451, 1.442695
        %v464 = vpow.pop %v463
        %v465 = vmul.f32 %v452, 1.442695
        %v466 = vpow.pop %v465
        %v467 = vmul.f32 %v453, 1.442695
        %v468 = vpow.pop %v467
        %v469 = vmul.f32 %v454, 1.442695
        %v470 = vpow.pop %v469
        %v471 = vadd.f32 %v456, 1.0
        %v472 = vadd.f32 %v458, 1.0
        %v473 = vadd.f32 %v460, 1.0
        %v474 = vadd.f32 %v462, 1.0
        %v475 = vadd.f32 %v464, 1.0
        %v476 = vadd.f32 %v466, 1.0
        %v477 = vadd.f32 %v468, 1.0
        %v478 = vadd.f32 %v470, 1.0
        %v479 = vrcp.pop %v471
        %v480 = vrcp.pop %v472
        %v481 = vrcp.pop %v473
        %v482 = vrcp.pop %v474
        %v483 = vrcp.pop %v475
        %v484 = vrcp.pop %v476
        %v485 = vrcp.pop %v477
        %v486 = vrcp.pop %v478
        %v487 = vmul.f32 %v401, %v479
        %v488 = vmul.f32 %v407, %v480
        %v489 = vmul.f32 %v413, %v481
        %v490 = vmul.f32 %v419, %v482
        %v491 = vmul.f32 %v425, %v483
        %v492 = vmul.f32 %v431, %v484
        %v493 = vmul.f32 %v437, %v485
        %v494 = vmul.f32 %v443, %v486
        %v495 = vmul.f32 %v487, %v403
        %v496 = vmul.f32 %v488, %v409
        %v497 = vmul.f32 %v489, %v415
        %v498 = vmul.f32 %v490, %v421
        %v499 = vmul.f32 %v491, %v427
        %v500 = vmul.f32 %v492, %v433
        %v501 = vmul.f32 %v493, %v439
        %v502 = vmul.f32 %v494, %v445
        %v503 = vld [vmem:[#allocation2] sm:$0xff]
        %v504 = vld [vmem:[#allocation2 + $0x8] sm:$0xff]
        %v505 = vld [vmem:[#allocation2 + $0x10] sm:$0xff]
        %v506 = vld [vmem:[#allocation2 + $0x18] sm:$0xff]
        %v507 = vld [vmem:[#allocation2 + $0x20] sm:$0xff]
        %v508 = vld [vmem:[#allocation2 + $0x28] sm:$0xff]
        %v509 = vld [vmem:[#allocation2 + $0x30] sm:$0xff]
        %v510 = vld [vmem:[#allocation2 + $0x38] sm:$0xff]
        %v511 = vld [vmem:[%s245] sm:$0xff]
        %v512 = vld [vmem:[%s245 + $0x8] sm:$0xff]
        %v513 = vld [vmem:[%s245 + $0x10] sm:$0xff]
        %v514 = vld [vmem:[%s245 + $0x18] sm:$0xff]
        %v515 = vld [vmem:[%s245 + $0x20] sm:$0xff]
        %v516 = vld [vmem:[%s245 + $0x28] sm:$0xff]
        %v517 = vld [vmem:[%s245 + $0x30] sm:$0xff]
        %v518 = vld [vmem:[%s245 + $0x38] sm:$0xff]
        %v519 = vld [vmem:[%s245 + $0x40] sm:$0xff]
        %v520 = vld [vmem:[%s245 + $0x48] sm:$0xff]
        %v521 = vld [vmem:[%s245 + $0x50] sm:$0xff]
        %v522 = vld [vmem:[%s245 + $0x58] sm:$0xff]
        %v523 = vld [vmem:[%s245 + $0x60] sm:$0xff]
        %v524 = vld [vmem:[%s245 + $0x68] sm:$0xff]
        %v525 = vld [vmem:[%s245 + $0x70] sm:$0xff]
        %v526 = vld [vmem:[%s245 + $0x78] sm:$0xff]
        %527 = vmatprep.subr.mxu0 0.0
        %528 = vmatpush1.msra.mxu0 %v511
        %529 = vmatprep.subr.mxu0 0.0
        %530 = vmatpush1.msra.mxu0 %v512
        %531 = vmatprep.subr.mxu0 0.0
        %532 = vmatpush1.msra.mxu0 %v513
        %533 = vmatprep.subr.mxu0 0.0
        %534 = vmatpush1.msra.mxu0 %v514
        %535 = vmatprep.subr.mxu0 0.0
        %536 = vmatpush1.msra.mxu0 %v515
        %537 = vmatprep.subr.mxu0 0.0
        %538 = vmatpush1.msra.mxu0 %v516
        %539 = vmatprep.subr.mxu0 0.0
        %540 = vmatpush1.msra.mxu0 %v517
        %541 = vmatprep.subr.mxu0 0.0
        %542 = vmatpush1.msra.mxu0 %v518
        %543 = vmatprep.subr.mxu0 0.0
        %544 = vmatpush1.msra.mxu0 %v519
        %545 = vmatprep.subr.mxu0 0.0
        %546 = vmatpush1.msra.mxu0 %v520
        %547 = vmatprep.subr.mxu0 0.0
        %548 = vmatpush1.msra.mxu0 %v521
        %549 = vmatprep.subr.mxu0 0.0
        %550 = vmatpush1.msra.mxu0 %v522
        %551 = vmatprep.subr.mxu0 0.0
        %552 = vmatpush1.msra.mxu0 %v523
        %553 = vmatprep.subr.mxu0 0.0
        %554 = vmatpush1.msra.mxu0 %v524
        %555 = vmatprep.subr.mxu0 0.0
        %556 = vmatpush1.msra.mxu0 %v525
        %557 = vmatprep.subr.mxu0 0.0
        %558 = vmatpush1.msra.mxu0 %v526
        %559 = vmatprep.subr.mxu0 0.0
        %560 = vmatpush1.msra.mxu0 0.0
        %561 = vmatprep.subr.mxu0 0.0
        %562 = vmatpush1.msra.mxu0 0.0
        %563 = vmatprep.subr.mxu0 0.0
        %564 = vmatpush1.msra.mxu0 0.0
        %565 = vmatprep.subr.mxu0 0.0
        %566 = vmatpush1.msra.mxu0 0.0
        %567 = vmatprep.subr.mxu0 0.0
        %568 = vmatpush1.msra.mxu0 0.0
        %569 = vmatprep.subr.mxu0 0.0
        %570 = vmatpush1.msra.mxu0 0.0
        %571 = vmatprep.subr.mxu0 0.0
        %572 = vmatpush1.msra.mxu0 0.0
        %573 = vmatprep.subr.mxu0 0.0
        %574 = vmatpush1.msra.mxu0 0.0
        %575 = vmatprep.subr.mxu0 0.0
        %576 = vmatpush1.msra.mxu0 0.0
        %577 = vmatprep.subr.mxu0 0.0
        %578 = vmatpush1.msra.mxu0 0.0
        %579 = vmatprep.subr.mxu0 0.0
        %580 = vmatpush1.msra.mxu0 0.0
        %581 = vmatprep.subr.mxu0 0.0
        %582 = vmatpush1.msra.mxu0 0.0
        %583 = vmatprep.subr.mxu0 0.0
        %584 = vmatpush1.msra.mxu0 0.0
        %585 = vmatprep.subr.mxu0 0.0
        %586 = vmatpush1.msra.mxu0 0.0
        %587 = vmatprep.subr.mxu0 0.0
        %588 = vmatpush1.msra.mxu0 0.0
        %589 = vmatprep.subr.mxu0 0.0
        %590 = vmatpush1.msra.mxu0 0.0
        %591 = vmatprep.mubr.f32.mxu0 0.0
        %592 = vmatmul.mubr.f32.gmra.mrb[0].mxu0 %v495
        %v593 = vpop.f32.mrb[0].mxu0
        %v594 = vadd.f32 0.0, %v593
        %v595 = vpop.f32.mrb[0].mxu0
        %596 = vmatprep.mubr.f32.mxu0 0.0
        %597 = vmatmul.mubr.f32.gmra.mrb[0].mxu0 %v496
        %v598 = vpop.f32.mrb[0].mxu0
        %v599 = vadd.f32 0.0, %v598
        %v600 = vpop.f32.mrb[0].mxu0
        %601 = vmatprep.mubr.f32.mxu0 0.0
        %602 = vmatmul.mubr.f32.gmra.mrb[0].mxu0 %v497
        %v603 = vpop.f32.mrb[0].mxu0
        %v604 = vadd.f32 0.0, %v603
        %v605 = vpop.f32.mrb[0].mxu0
        %606 = vmatprep.mubr.f32.mxu0 0.0
        %607 = vmatmul.mubr.f32.gmra.mrb[0].mxu0 %v498
        %v608 = vpop.f32.mrb[0].mxu0
        %v609 = vadd.f32 0.0, %v608
        %v610 = vpop.f32.mrb[0].mxu0
        %611 = vmatprep.mubr.f32.mxu0 0.0
        %612 = vmatmul.mubr.f32.gmra.mrb[0].mxu0 %v499
        %v613 = vpop.f32.mrb[0].mxu0
        %v614 = vadd.f32 0.0, %v613
        %v615 = vpop.f32.mrb[0].mxu0
        %616 = vmatprep.mubr.f32.mxu0 0.0
        %617 = vmatmul.mubr.f32.gmra.mrb[0].mxu0 %v500
        %v618 = vpop.f32.mrb[0].mxu0
        %v619 = vadd.f32 0.0, %v618
        %v620 = vpop.f32.mrb[0].mxu0
        %621 = vmatprep.mubr.f32.mxu0 0.0
        %622 = vmatmul.mubr.f32.gmra.mrb[0].mxu0 %v501
        %v623 = vpop.f32.mrb[0].mxu0
        %v624 = vadd.f32 0.0, %v623
        %v625 = vpop.f32.mrb[0].mxu0
        %626 = vmatprep.mubr.f32.mxu0 0.0
        %627 = vmatmul.mubr.f32.gmra.mrb[0].mxu0 %v502
        %v628 = vpop.f32.mrb[0].mxu0
        %v629 = vadd.f32 0.0, %v628
        %v630 = vpop.f32.mrb[0].mxu0
        %631 = vdwg.mxu0
        %v632 = vadd.f32 %v503, %v594
        %v633 = vadd.f32 %v504, %v599
        %v634 = vadd.f32 %v505, %v604
        %v635 = vadd.f32 %v506, %v609
        %v636 = vadd.f32 %v507, %v614
        %v637 = vadd.f32 %v508, %v619
        %v638 = vadd.f32 %v509, %v624
        %v639 = vadd.f32 %v510, %v629
        %640 = vst [vmem:[#allocation2] sm:$0xff] %v632
        %641 = vst [vmem:[#allocation2 + $0x8] sm:$0xff] %v633
        %642 = vst [vmem:[#allocation2 + $0x10] sm:$0xff] %v634
        %643 = vst [vmem:[#allocation2 + $0x18] sm:$0xff] %v635
        %644 = vst [vmem:[#allocation2 + $0x20] sm:$0xff] %v636
        %645 = vst [vmem:[#allocation2 + $0x28] sm:$0xff] %v637
        %646 = vst [vmem:[#allocation2 + $0x30] sm:$0xff] %v638
        %647 = vst [vmem:[#allocation2 + $0x38] sm:$0xff] %v639
        %p648 = scmp.eq.s32.totalorder %s28, 1
        // Predicated region
        $region49: #{tpu_custom_call.1} parent=31 // pred_check
          %p649 = pneg %p648
        $region50: #{tpu_custom_call.1} parent=31 // pred_check_branch
          %651 = sbr.rel (%p649) target = $region52
        $region51: #{tpu_custom_call.1} parent=31 // pred_region
          %v652 = vld [vmem:[#allocation2] sm:$0xff]
          %v653 = vld [vmem:[#allocation2 + $0x8] sm:$0xff]
          %v654 = vld [vmem:[#allocation2 + $0x10] sm:$0xff]
          %v655 = vld [vmem:[#allocation2 + $0x18] sm:$0xff]
          %v656 = vld [vmem:[#allocation2 + $0x20] sm:$0xff]
          %v657 = vld [vmem:[#allocation2 + $0x28] sm:$0xff]
          %v658 = vld [vmem:[#allocation2 + $0x30] sm:$0xff]
          %v659 = vld [vmem:[#allocation2 + $0x38] sm:$0xff]
          %660 = vst [vmem:[%s277] sm:$0xff] %v652
          %661 = vst [vmem:[%s277 + $0x8] sm:$0xff] %v653
          %662 = vst [vmem:[%s277 + $0x10] sm:$0xff] %v654
          %663 = vst [vmem:[%s277 + $0x18] sm:$0xff] %v655
          %664 = vst [vmem:[%s277 + $0x20] sm:$0xff] %v656
          %665 = vst [vmem:[%s277 + $0x28] sm:$0xff] %v657
          %666 = vst [vmem:[%s277 + $0x30] sm:$0xff] %v658
          %667 = vst [vmem:[%s277 + $0x38] sm:$0xff] %v659
        $region52: #{tpu_custom_call.1} parent=31 // pred_fallthru
          _
        %s668 = sand.u32 %s121, 1
        %s669 = scalar_lea.sflag [#allocation5], %s668
        %s670 = sand.u32 %s121, 1
        %s671 = smul.addr %s670, 64
        %s672 = scalar_lea.vmem [#allocation9], %s671
        // Predicated region
        $region53: #{tpu_custom_call.1} parent=31 // pred_check
          %p673 = pneg %p131
        $region54: #{tpu_custom_call.1} parent=31 // pred_check_branch
          %675 = sbr.rel (%p673) target = $region56
        $region55: #{tpu_custom_call.1} parent=31 // pred_region
          %s676 = smul.u32 8, %s27
          %s678 = ssub.s32 1024, 1024
          %679 = vsyncadd %s669, %s678
          %s680 = smul.addr %s676, 128
          %s681 = scalar_lea.hbm %s3, %s680
          %s682 = sshll.u32 %s672, 4
          %s683 = int_to_ptr.vmem [resolvable:$true] %s682
          %688 = dma.vmem_to_hbm [thread:$0]  %s683, 1024, %s681, %s669, 128, 128, 8
        $region56: #{tpu_custom_call.1} parent=31 // pred_fallthru
          _
      $region32: #{tpu_custom_call.1} parent=5 // pred_fallthru
        _
      %p689 = scmp.le.s32.totalorder 2, %s18
      // Predicated region
      $region57: #{tpu_custom_call.1} parent=5 // pred_check
        %p690 = pneg %p689
      $region58: #{tpu_custom_call.1} parent=5 // pred_check_branch
        %692 = sbr.rel (%p690) target = $region60
      $region59: #{tpu_custom_call.1} parent=5 // pred_region
        %s693 = ssub.s32 %s18, 2
        // Predicated region
        $region61: #{tpu_custom_call.1} parent=59 // pred_check
          %p694 = pneg %p137
        $region62: #{tpu_custom_call.1} parent=59 // pred_check_branch
          %696 = sbr.rel (%p694) target = $region64
        $region63: #{tpu_custom_call.1} parent=59 // pred_region
          %s697 = sand.u32 %s122, 1
          %s698 = scalar_lea.sflag [#allocation5], %s697
          %s699 = sand.u32 %s122, 1
          %s700 = smul.addr %s699, 64
          %s701 = scalar_lea.vmem [#allocation9], %s700
          %702 = dma.done %s698, 1024
        $region64: #{tpu_custom_call.1} parent=59 // pred_fallthru
          _
      $region60: #{tpu_custom_call.1} parent=5 // pred_fallthru
        _
    $region6: #{tpu_custom_call.1} parent=1 // loop_footer
      %s22 = sadd.s32 1, %s18
    $region7: #{tpu_custom_call.1} parent=1 // loop_footer_branch
      %17 = sbr.rel target = $region3
    $region8: #{tpu_custom_call.1} parent=1 // loop_exit
      _
    %703 = vsyncpa [#allocation4], 1
    %s704 = scalar_lea.sflag [#allocation4], 1
    %705 = vsyncpa %s704, 1
    %706 = vsyncpa [#allocation7], 1
    %s707 = scalar_lea.sflag [#allocation7], 1
    %708 = vsyncpa %s707, 1
    %709 = vsyncpa [#allocation5], 1
    %s710 = scalar_lea.sflag [#allocation5], 1
    %711 = vsyncpa %s710, 1

</llo_original>
